<compile_context>
chip_gen: v6e
topology: v6e:2x2x1
jax: 0.10.0
libtpu: 0.0.40
codegen_flags: <defaults>
</compile_context>

<pallas_src>
import math
import functools

import jax
import jax.numpy as jnp
from jax.experimental import pallas as pl
from jax.experimental.pallas import tpu as pltpu

Z_DIM = 32
N_HEAD = 4
C = 8
EPS = 1e-5  # torch.nn.LayerNorm default


def _pick_tile(n, target):
    """Largest divisor of n that is <= target and nicely aligned; else n (full dim)."""
    if n <= target:
        return n
    for align in (16, 8):
        start = target - (target % align)
        for t in range(start, align - 1, -align):
            if n % t == 0:
                return t
    return n


# ---------------------------------------------------------------------------
# Kernel 1: LayerNorm + single packed projection (q|k|v|g|b) per row tile.
# ---------------------------------------------------------------------------
def _proj_kernel(z_ref, gamma_ref, beta_ref, wpk_ref, bpk_ref, qkvg_ref, bprj_ref):
    z = z_ref[...]                                        # (TN, D) f32
    mean = jnp.mean(z, axis=-1, keepdims=True)
    cen = z - mean
    var = jnp.mean(cen * cen, axis=-1, keepdims=True)
    zn = cen * jax.lax.rsqrt(var + EPS) * gamma_ref[...] + beta_ref[...]

    # One MXU pass: (TN, D) @ (D, 4*hc + H); bf16 operands, f32 accumulation.
    y = jnp.dot(zn.astype(jnp.bfloat16), wpk_ref[...],
                preferred_element_type=jnp.float32) + bpk_ref[...]   # (TN, 4*hc+H) f32

    hc4 = qkvg_ref.shape[-1]                              # 4*hc (= 128, lane-dense)
    hc = hc4 // 4
    lin = y[:, :hc4]                                      # [q | k | v | g]
    col = jax.lax.broadcasted_iota(jnp.int32, lin.shape, 1)
    # sigmoid runs on the EUP (separate issue slot); select keeps the store lane-dense/unmasked.
    act = jnp.where(col >= 3 * hc, jax.nn.sigmoid(lin), lin)
    qkvg_ref[...] = act.astype(jnp.bfloat16)
    bprj_ref[...] = y[:, hc4:]                            # (TN, H) f32 bias logits


# ---------------------------------------------------------------------------
# Kernel 2: per-(head, l-tile) triangle attention + sigmoid gating.
#   q/g/out blocks: (1, TL, L*c)   kT block: (1, L*c, L)   v block: (1, L, L*c)
#   bias block:     (1, TL, L)
# ---------------------------------------------------------------------------
def _attn_kernel(q_ref, kT_ref, v_ref, g_ref, b_ref, o_ref, *, scale):
    q = q_ref[0]                                          # (TL, L*c) bf16
    kT = kT_ref[0]                                        # (L*c, L) bf16 (pre-transposed)

    # att[l, k] = sum_{b,c} q[b,l,h,c] * k[b,k,h,c]  -> plain 2-D MXU matmul
    att = jnp.dot(q, kT, preferred_element_type=jnp.float32)          # (TL, L) f32
    att = att * scale + b_ref[0]

    # softmax over k (torch dim=1), f32
    att = att - jnp.max(att, axis=-1, keepdims=True)
    e = jnp.exp(att)
    p = e * pl.reciprocal(jnp.sum(e, axis=-1, keepdims=True), approx=True)

    # o[l, (b,c)] = sum_k p[l,k] * v[k, (b,c)]
    o = jnp.dot(p.astype(jnp.bfloat16), v_ref[0],
                preferred_element_type=jnp.float32)                   # (TL, L*c) f32
    o_ref[0] = (g_ref[0].astype(jnp.float32) * o).astype(jnp.bfloat16)


# ---------------------------------------------------------------------------
# Kernel 3: row-tiled output projection.
# ---------------------------------------------------------------------------
def _outproj_kernel(x_ref, wo_ref, bo_ref, o_ref):
    o_ref[...] = jnp.dot(x_ref[...], wo_ref[...],
                         preferred_element_type=jnp.float32) + bo_ref[...]


# ---------------------------------------------------------------------------
# Parameters (deterministic synthetic init; weights stored as (in, out), f32).
# ---------------------------------------------------------------------------
def init_params(key, z_dim=Z_DIM, n_head=N_HEAD, c=C):
    hc = n_head * c
    ks = jax.random.split(key, 14)

    def lin(kw, kb, fan_in, fan_out):
        w = jax.random.normal(kw, (fan_in, fan_out), jnp.float32) / math.sqrt(fan_in)
        b = 0.1 * jax.random.normal(kb, (fan_out,), jnp.float32)
        return w, b

    p = {}
    p["gamma"] = 1.0 + 0.1 * jax.random.normal(ks[0], (z_dim,), jnp.float32)
    p["beta"] = 0.1 * jax.random.normal(ks[1], (z_dim,), jnp.float32)
    p["wq"], p["bq"] = lin(ks[2], ks[3], z_dim, hc)
    p["wk"], p["bk"] = lin(ks[4], ks[5], z_dim, hc)
    p["wv"], p["bv"] = lin(ks[6], ks[7], z_dim, hc)
    p["wb"], p["bb"] = lin(ks[8], ks[9], z_dim, n_head)
    p["wg"], p["bg"] = lin(ks[10], ks[11], z_dim, hc)
    p["wo"], p["bo"] = lin(ks[12], ks[13], hc, z_dim)
    return p


# ---------------------------------------------------------------------------
# Forward pass wrapper.
# ---------------------------------------------------------------------------
def tri_att_start(z, params, n_head=N_HEAD, c=C):
    L1, L2, D = z.shape
    assert L1 == L2, "TriAttStart requires L1 == L2 (att + b broadcast)"
    L = L1
    N = L * L
    hc = n_head * c
    Lc = L * c

    # ---- pack the five projections into one (D, 4*hc + H) weight (bf16 operands) ----
    w_pack = jnp.concatenate(
        [params["wq"], params["wk"], params["wv"], params["wg"], params["wb"]],
        axis=1).astype(jnp.bfloat16)                               # (D, 4*hc + H)
    b_pack = jnp.concatenate(
        [params["bq"], params["bk"], params["bv"], params["bg"], params["bb"]]
    ).reshape(1, -1)                                               # (1, 4*hc + H) f32
    wtot = 4 * hc + n_head

    # ---- Kernel 1: row-tiled LayerNorm + packed projection ----
    TN = _pick_tile(N, 4096)
    packed, bprj = pl.pallas_call(
        _proj_kernel,
        grid=(N // TN,),
        in_specs=[
            pl.BlockSpec((TN, D), lambda i: (i, 0)),
            pl.BlockSpec((1, D), lambda i: (0, 0)),
            pl.BlockSpec((1, D), lambda i: (0, 0)),
            pl.BlockSpec((D, wtot), lambda i: (0, 0)),
            pl.BlockSpec((1, wtot), lambda i: (0, 0)),
        ],
        out_specs=(
            pl.BlockSpec((TN, 4 * hc), lambda i: (i, 0)),
            pl.BlockSpec((TN, n_head), lambda i: (i, 0)),
        ),
        out_shape=(
            jax.ShapeDtypeStruct((N, 4 * hc), jnp.bfloat16),
            jax.ShapeDtypeStruct((N, n_head), jnp.float32),
        ),
        compiler_params=pltpu.CompilerParams(dimension_semantics=("parallel",)),
    )(z.reshape(N, D), params["gamma"].reshape(1, D), params["beta"].reshape(1, D),
      w_pack, b_pack)

    # ---- XLA glue: per-head slabs (bf16); K is pre-transposed so no in-kernel transpose ----
    p4 = packed.reshape(L, L, 4, n_head, c)                        # [b, l, {q,k,v,g}, h, c']
    qh = p4[:, :, 0].transpose(2, 1, 0, 3).reshape(n_head, L, Lc)  # [h, l, b*c+c']
    khT = p4[:, :, 1].transpose(2, 0, 3, 1).reshape(n_head, Lc, L)  # [h, b*c+c', k]
    vh = p4[:, :, 2].transpose(2, 1, 0, 3).reshape(n_head, L, Lc)  # [h, k, b*c+c']
    gh = p4[:, :, 3].transpose(2, 1, 0, 3).reshape(n_head, L, Lc)  # [h, l, b*c+c']
    bph = bprj.reshape(L, L, n_head).transpose(2, 0, 1)            # [h, l, k] f32

    # ---- Kernel 2: attention + gating, grid (head, l-tile), k/v resident across l-tiles ----
    TL = _pick_tile(L, 256)
    scale = (1.0 / math.sqrt(c)) / math.sqrt(L2)
    spec_lt = pl.BlockSpec((1, TL, Lc), lambda h, j: (h, j, 0))
    spec_kT = pl.BlockSpec((1, Lc, L), lambda h, j: (h, 0, 0))
    spec_v = pl.BlockSpec((1, L, Lc), lambda h, j: (h, 0, 0))
    spec_b = pl.BlockSpec((1, TL, L), lambda h, j: (h, j, 0))

    go = pl.pallas_call(
        functools.partial(_attn_kernel, scale=scale),
        grid=(n_head, L // TL),
        in_specs=[spec_lt, spec_kT, spec_v, spec_lt, spec_b],
        out_specs=spec_lt,
        out_shape=jax.ShapeDtypeStruct((n_head, L, Lc), jnp.bfloat16),
        compiler_params=pltpu.CompilerParams(
            dimension_semantics=("parallel", "parallel")),
    )(qh, khT, vh, gh, bph)

    # ---- XLA glue: head-slabs -> flat (N, hc), rows (b*L + l), cols (h*c + c') ----
    o_flat = go.reshape(n_head, L, L, c).transpose(2, 1, 0, 3).reshape(N, hc)

    # ---- Kernel 3: row-tiled output projection ----
    TN2 = _pick_tile(N, 4096)
    out = pl.pallas_call(
        _outproj_kernel,
        grid=(N // TN2,),
        in_specs=[
            pl.BlockSpec((TN2, hc), lambda i: (i, 0)),
            pl.BlockSpec((hc, D), lambda i: (0, 0)),
            pl.BlockSpec((1, D), lambda i: (0, 0)),
        ],
        out_specs=pl.BlockSpec((TN2, D), lambda i: (i, 0)),
        out_shape=jax.ShapeDtypeStruct((N, D), jnp.float32),
        compiler_params=pltpu.CompilerParams(dimension_semantics=("parallel",)),
    )(o_flat, params["wo"].astype(jnp.bfloat16), params["bo"].reshape(1, D))

    return out.reshape(L, L, D)


# ---------------------------------------------------------------------------
# Pure-JAX reference (mirrors the PyTorch training branch exactly, f32).
# ---------------------------------------------------------------------------
def reference(z, params, n_head=N_HEAD, c=C):
    L1, L2, D = z.shape
    hp = jax.lax.Precision.HIGHEST
    mean = z.mean(-1, keepdims=True)
    var = ((z - mean) ** 2).mean(-1, keepdims=True)
    zn = (z - mean) / jnp.sqrt(var + EPS) * params["gamma"] + params["beta"]
    q = (jnp.dot(zn, params["wq"], precision=hp) + params["bq"]).reshape(L1, L2, n_head, c)
    k = (jnp.dot(zn, params["wk"], precision=hp) + params["bk"]).reshape(L1, L2, n_head, c)
    v = (jnp.dot(zn, params["wv"], precision=hp) + params["bv"]).reshape(L1, L2, n_head, c)
    b = jnp.dot(zn, params["wb"], precision=hp) + params["bb"]
    g = jax.nn.sigmoid(jnp.dot(zn, params["wg"], precision=hp) + params["bg"]
                       ).reshape(L1, L2, n_head, c)
    att = jnp.einsum('blhc,bkhc->lkh', q, k, precision=hp) * \
        ((1.0 / math.sqrt(c)) / math.sqrt(L2)) + b
    att = jax.nn.softmax(att, axis=1)
    o = jnp.einsum('lkh,bkhc->blhc', att, v, precision=hp)
    o = (g * o).reshape(L1, L2, n_head * c)
    return jnp.dot(o, params["wo"], precision=hp) + params["bo"]


if __name__ == "__main__":
    key = jax.random.PRNGKey(0)
    kz, kp = jax.random.split(key)

    L = 8
    z = jax.random.normal(kz, (L, L, Z_DIM), jnp.float32)
    params = init_params(kp)

    out = jax.jit(tri_att_start)(z, params)
    out = jax.block_until_ready(out)
    assert out.shape == (L, L, Z_DIM)

    ref = reference(z, params)
    # Tolerance accounts for bf16 MXU operands (f32 accumulation) vs the HIGHEST-precision
    # f32 reference.
    if not jnp.allclose(out, ref, atol=2e-2, rtol=2e-2):
        raise AssertionError(
            f"mismatch vs reference, max abs err = {float(jnp.max(jnp.abs(out - ref)))}")

    print("KERNEL_OK")
</pallas_src>

<mosaic_0001>
module attributes {stable_mosaic.version = 11 : i64} {
  func.func @_proj_kernel(%arg0: i32, %arg1: memref<64x32xf32, #tpu.memory_space<vmem>>, %arg2: memref<1x32xf32, #tpu.memory_space<vmem>>, %arg3: memref<1x32xf32, #tpu.memory_space<vmem>>, %arg4: memref<32x132xbf16, #tpu.memory_space<vmem>>, %arg5: memref<1x132xf32, #tpu.memory_space<vmem>>, %arg6: memref<64x128xbf16, #tpu.memory_space<vmem>>, %arg7: memref<64x4xf32, #tpu.memory_space<vmem>>) attributes {dimension_semantics = [#tpu.dimension_semantics<parallel>], iteration_bounds = array<i64: 1>, scalar_prefetch = 0 : i64, scratch_operands = 0 : i64, tpu.core_type = #tpu.core_type<tc>, window_params = [{transform_indices = @transform_0, window_bounds = array<i64: 64, 32>}, {pipeline_mode = #tpu.pipeline_mode<synchronous>, transform_indices = @transform_1, window_bounds = array<i64: 1, 32>}, {pipeline_mode = #tpu.pipeline_mode<synchronous>, transform_indices = @transform_2, window_bounds = array<i64: 1, 32>}, {pipeline_mode = #tpu.pipeline_mode<synchronous>, transform_indices = @transform_3, window_bounds = array<i64: 32, 132>}, {pipeline_mode = #tpu.pipeline_mode<synchronous>, transform_indices = @transform_4, window_bounds = array<i64: 1, 132>}, {transform_indices = @transform_5, window_bounds = array<i64: 64, 128>}, {transform_indices = @transform_6, window_bounds = array<i64: 64, 4>}]} {
    %c0 = arith.constant 0 : index
    %c0_0 = arith.constant 0 : index
    %0 = vector.load %arg1[%c0, %c0_0] : memref<64x32xf32, #tpu.memory_space<vmem>>, vector<64x32xf32>
    %cst = arith.constant dense<0.000000e+00> : vector<64xf32>
    %1 = vector.multi_reduction <add>, %0, %cst [1] : vector<64x32xf32> to vector<64xf32>
    %2 = vector.shape_cast %1 : vector<64xf32> to vector<64x1xf32>
    %cst_1 = arith.constant 3.200000e+01 : f32
    %3 = vector.broadcast %cst_1 : f32 to vector<64x1xf32>
    %4 = arith.divf %2, %3 : vector<64x1xf32>
    %5 = vector.broadcast %4 : vector<64x1xf32> to vector<64x32xf32>
    %6 = arith.subf %0, %5 : vector<64x32xf32>
    %7 = arith.mulf %6, %6 : vector<64x32xf32>
    %cst_2 = arith.constant dense<0.000000e+00> : vector<64xf32>
    %8 = vector.multi_reduction <add>, %7, %cst_2 [1] : vector<64x32xf32> to vector<64xf32>
    %9 = vector.shape_cast %8 : vector<64xf32> to vector<64x1xf32>
    %cst_3 = arith.constant 3.200000e+01 : f32
    %10 = vector.broadcast %cst_3 : f32 to vector<64x1xf32>
    %11 = arith.divf %9, %10 : vector<64x1xf32>
    %cst_4 = arith.constant 9.99999974E-6 : f32
    %12 = vector.broadcast %cst_4 : f32 to vector<64x1xf32>
    %13 = arith.addf %11, %12 : vector<64x1xf32>
    %14 = math.rsqrt %13 : vector<64x1xf32>
    %15 = vector.broadcast %14 : vector<64x1xf32> to vector<64x32xf32>
    %16 = arith.mulf %6, %15 : vector<64x32xf32>
    %c0_5 = arith.constant 0 : index
    %c0_6 = arith.constant 0 : index
    %17 = vector.load %arg2[%c0_5, %c0_6] : memref<1x32xf32, #tpu.memory_space<vmem>>, vector<1x32xf32>
    %18 = vector.broadcast %17 : vector<1x32xf32> to vector<64x32xf32>
    %19 = arith.mulf %16, %18 : vector<64x32xf32>
    %c0_7 = arith.constant 0 : index
    %c0_8 = arith.constant 0 : index
    %20 = vector.load %arg3[%c0_7, %c0_8] : memref<1x32xf32, #tpu.memory_space<vmem>>, vector<1x32xf32>
    %21 = vector.broadcast %20 : vector<1x32xf32> to vector<64x32xf32>
    %22 = arith.addf %19, %21 : vector<64x32xf32>
    %23 = arith.truncf %22 : vector<64x32xf32> to vector<64x32xbf16>
    %c0_9 = arith.constant 0 : index
    %c0_10 = arith.constant 0 : index
    %24 = vector.load %arg4[%c0_9, %c0_10] : memref<32x132xbf16, #tpu.memory_space<vmem>>, vector<32x132xbf16>
    %cst_11 = arith.constant dense<0.000000e+00> : vector<64x132xf32>
    %25 = tpu.matmul %23, %24, %cst_11 {dimension_numbers = #tpu.dot_dimension_numbers<[1], [0], [0], [1], [0, 0, 1, 1], [], []>} : vector<64x32xbf16>, vector<32x132xbf16>, vector<64x132xf32> -> vector<64x132xf32>
    %c0_12 = arith.constant 0 : index
    %c0_13 = arith.constant 0 : index
    %26 = vector.load %arg5[%c0_12, %c0_13] : memref<1x132xf32, #tpu.memory_space<vmem>>, vector<1x132xf32>
    %27 = vector.broadcast %26 : vector<1x132xf32> to vector<64x132xf32>
    %28 = arith.addf %25, %27 : vector<64x132xf32>
    %29 = vector.extract_strided_slice %28 {offsets = [0, 0], sizes = [64, 128], strides = [1, 1]} : vector<64x132xf32> to vector<64x128xf32>
    %30 = tpu.iota {dimensions = array<i32: 1>} : vector<64x128xi32>
    %c96_i32 = arith.constant 96 : i32
    %31 = vector.broadcast %c96_i32 : i32 to vector<64x128xi32>
    %32 = arith.cmpi sge, %30, %31 : vector<64x128xi32>
    %33 = arith.negf %29 : vector<64x128xf32>
    %34 = math.exp %33 : vector<64x128xf32>
    %cst_14 = arith.constant 1.000000e+00 : f32
    %35 = vector.broadcast %cst_14 : f32 to vector<64x128xf32>
    %36 = arith.addf %35, %34 : vector<64x128xf32>
    %37 = arith.divf %35, %36 : vector<64x128xf32>
    %38 = arith.select %32, %37, %29 : vector<64x128xi1>, vector<64x128xf32>
    %39 = arith.truncf %38 : vector<64x128xf32> to vector<64x128xbf16>
    %c0_15 = arith.constant 0 : index
    %c0_16 = arith.constant 0 : index
    %40 = vector.load %arg6[%c0_15, %c0_16] : memref<64x128xbf16, #tpu.memory_space<vmem>>, vector<64x128xbf16>
    tpu.vector_store %arg6[%c0_15, %c0_16], %39 {strides = array<i32>} : memref<64x128xbf16, #tpu.memory_space<vmem>>, vector<64x128xbf16>,
    %41 = vector.extract_strided_slice %28 {offsets = [0, 128], sizes = [64, 4], strides = [1, 1]} : vector<64x132xf32> to vector<64x4xf32>
    %c0_17 = arith.constant 0 : index
    %c0_18 = arith.constant 0 : index
    %42 = vector.load %arg7[%c0_17, %c0_18] : memref<64x4xf32, #tpu.memory_space<vmem>>, vector<64x4xf32>
    tpu.vector_store %arg7[%c0_17, %c0_18], %41 {strides = array<i32>} : memref<64x4xf32, #tpu.memory_space<vmem>>, vector<64x4xf32>,
    return
  }
  func.func @transform_0(%arg0: i32) -> (i32, i32) {
    %c0_i32 = arith.constant 0 : i32
    %c0_i32_0 = arith.constant 0 : i32
    return %arg0, %c0_i32 : i32, i32
  }
  func.func @transform_1(%arg0: i32) -> (i32, i32) {
    %c0_i32 = arith.constant 0 : i32
    %c0_i32_0 = arith.constant 0 : i32
    %c0_i32_1 = arith.constant 0 : i32
    return %c0_i32, %c0_i32_0 : i32, i32
  }
  func.func @transform_2(%arg0: i32) -> (i32, i32) {
    %c0_i32 = arith.constant 0 : i32
    %c0_i32_0 = arith.constant 0 : i32
    %c0_i32_1 = arith.constant 0 : i32
    return %c0_i32, %c0_i32_0 : i32, i32
  }
  func.func @transform_3(%arg0: i32) -> (i32, i32) {
    %c0_i32 = arith.constant 0 : i32
    %c0_i32_0 = arith.constant 0 : i32
    %c0_i32_1 = arith.constant 0 : i32
    return %c0_i32, %c0_i32_0 : i32, i32
  }
  func.func @transform_4(%arg0: i32) -> (i32, i32) {
    %c0_i32 = arith.constant 0 : i32
    %c0_i32_0 = arith.constant 0 : i32
    %c0_i32_1 = arith.constant 0 : i32
    return %c0_i32, %c0_i32_0 : i32, i32
  }
  func.func @transform_5(%arg0: i32) -> (i32, i32) {
    %c0_i32 = arith.constant 0 : i32
    %c0_i32_0 = arith.constant 0 : i32
    return %arg0, %c0_i32 : i32, i32
  }
  func.func @transform_6(%arg0: i32) -> (i32, i32) {
    %c0_i32 = arith.constant 0 : i32
    %c0_i32_0 = arith.constant 0 : i32
    return %arg0, %c0_i32 : i32, i32
  }
}

module attributes {stable_mosaic.version = 11 : i64} {
  func.func @_attn_kernel(%arg0: i32, %arg1: i32, %arg2: memref<1x8x64xbf16, #tpu.memory_space<vmem>>, %arg3: memref<1x64x8xbf16, #tpu.memory_space<vmem>>, %arg4: memref<1x8x64xbf16, #tpu.memory_space<vmem>>, %arg5: memref<1x8x64xbf16, #tpu.memory_space<vmem>>, %arg6: memref<1x8x8xf32, #tpu.memory_space<vmem>>, %arg7: memref<1x8x64xbf16, #tpu.memory_space<vmem>>) attributes {dimension_semantics = [#tpu.dimension_semantics<parallel>, #tpu.dimension_semantics<parallel>], iteration_bounds = array<i64: 4, 1>, scalar_prefetch = 0 : i64, scratch_operands = 0 : i64, tpu.core_type = #tpu.core_type<tc>, window_params = [{transform_indices = @transform_0, window_bounds = array<i64: 1, 8, 64>}, {transform_indices = @transform_1, window_bounds = array<i64: 1, 64, 8>}, {transform_indices = @transform_2, window_bounds = array<i64: 1, 8, 64>}, {transform_indices = @transform_3, window_bounds = array<i64: 1, 8, 64>}, {transform_indices = @transform_4, window_bounds = array<i64: 1, 8, 8>}, {transform_indices = @transform_5, window_bounds = array<i64: 1, 8, 64>}]} {
    %c0 = arith.constant 0 : index
    %c0_0 = arith.constant 0 : index
    %c0_1 = arith.constant 0 : index
    %0 = vector.load %arg2[%c0, %c0_0, %c0_1] : memref<1x8x64xbf16, #tpu.memory_space<vmem>>, vector<1x8x64xbf16>
    %1 = vector.shape_cast %0 : vector<1x8x64xbf16> to vector<8x64xbf16>
    %c0_2 = arith.constant 0 : index
    %c0_3 = arith.constant 0 : index
    %c0_4 = arith.constant 0 : index
    %2 = vector.load %arg3[%c0_2, %c0_3, %c0_4] : memref<1x64x8xbf16, #tpu.memory_space<vmem>>, vector<1x64x8xbf16>
    %3 = vector.shape_cast %2 : vector<1x64x8xbf16> to vector<64x8xbf16>
    %cst = arith.constant dense<0.000000e+00> : vector<8x8xf32>
    %4 = tpu.matmul %1, %3, %cst {dimension_numbers = #tpu.dot_dimension_numbers<[1], [0], [0], [1], [0, 0, 1, 1], [], []>} : vector<8x64xbf16>, vector<64x8xbf16>, vector<8x8xf32> -> vector<8x8xf32>
    %cst_5 = arith.constant 1.250000e-01 : f32
    %5 = vector.broadcast %cst_5 : f32 to vector<8x8xf32>
    %6 = arith.mulf %4, %5 : vector<8x8xf32>
    %c0_6 = arith.constant 0 : index
    %c0_7 = arith.constant 0 : index
    %c0_8 = arith.constant 0 : index
    %7 = vector.load %arg6[%c0_6, %c0_7, %c0_8] : memref<1x8x8xf32, #tpu.memory_space<vmem>>, vector<1x8x8xf32>
    %8 = vector.shape_cast %7 : vector<1x8x8xf32> to vector<8x8xf32>
    %9 = arith.addf %6, %8 : vector<8x8xf32>
    %cst_9 = arith.constant dense<0xFF800000> : vector<8xf32>
    %10 = vector.multi_reduction <maximumf>, %9, %cst_9 [1] : vector<8x8xf32> to vector<8xf32>
    %11 = vector.shape_cast %10 : vector<8xf32> to vector<8x1xf32>
    %12 = vector.broadcast %11 : vector<8x1xf32> to vector<8x8xf32>
    %13 = arith.subf %9, %12 : vector<8x8xf32>
    %14 = math.exp %13 : vector<8x8xf32>
    %cst_10 = arith.constant dense<0.000000e+00> : vector<8xf32>
    %15 = vector.multi_reduction <add>, %14, %cst_10 [1] : vector<8x8xf32> to vector<8xf32>
    %16 = vector.shape_cast %15 : vector<8xf32> to vector<8x1xf32>
    %17 = tpu.reciprocal %16 {approx = true} : vector<8x1xf32> -> vector<8x1xf32>
    %18 = vector.broadcast %17 : vector<8x1xf32> to vector<8x8xf32>
    %19 = arith.mulf %14, %18 : vector<8x8xf32>
    %20 = arith.truncf %19 : vector<8x8xf32> to vector<8x8xbf16>
    %c0_11 = arith.constant 0 : index
    %c0_12 = arith.constant 0 : index
    %c0_13 = arith.constant 0 : index
    %21 = vector.load %arg4[%c0_11, %c0_12, %c0_13] : memref<1x8x64xbf16, #tpu.memory_space<vmem>>, vector<1x8x64xbf16>
    %22 = vector.shape_cast %21 : vector<1x8x64xbf16> to vector<8x64xbf16>
    %cst_14 = arith.constant dense<0.000000e+00> : vector<8x64xf32>
    %23 = tpu.matmul %20, %22, %cst_14 {dimension_numbers = #tpu.dot_dimension_numbers<[1], [0], [0], [1], [0, 0, 1, 1], [], []>} : vector<8x8xbf16>, vector<8x64xbf16>, vector<8x64xf32> -> vector<8x64xf32>
    %c0_15 = arith.constant 0 : index
    %c0_16 = arith.constant 0 : index
    %c0_17 = arith.constant 0 : index
    %24 = vector.load %arg5[%c0_15, %c0_16, %c0_17] : memref<1x8x64xbf16, #tpu.memory_space<vmem>>, vector<1x8x64xbf16>
    %25 = vector.shape_cast %24 : vector<1x8x64xbf16> to vector<8x64xbf16>
    %26 = arith.extf %25 : vector<8x64xbf16> to vector<8x64xf32>
    %27 = arith.mulf %26, %23 : vector<8x64xf32>
    %28 = arith.truncf %27 : vector<8x64xf32> to vector<8x64xbf16>
    %c0_18 = arith.constant 0 : index
    %c0_19 = arith.constant 0 : index
    %c0_20 = arith.constant 0 : index
    %29 = vector.load %arg7[%c0_18, %c0_19, %c0_20] : memref<1x8x64xbf16, #tpu.memory_space<vmem>>, vector<1x8x64xbf16>
    %30 = vector.shape_cast %29 : vector<1x8x64xbf16> to vector<8x64xbf16>
    %31 = vector.shape_cast %28 : vector<8x64xbf16> to vector<1x8x64xbf16>
    tpu.vector_store %arg7[%c0_18, %c0_19, %c0_20], %31 {strides = array<i32>} : memref<1x8x64xbf16, #tpu.memory_space<vmem>>, vector<1x8x64xbf16>,
    return
  }
  func.func @transform_0(%arg0: i32, %arg1: i32) -> (i32, i32, i32) {
    %c0_i32 = arith.constant 0 : i32
    %c0_i32_0 = arith.constant 0 : i32
    return %arg0, %arg1, %c0_i32 : i32, i32, i32
  }
  func.func @transform_1(%arg0: i32, %arg1: i32) -> (i32, i32, i32) {
    %c0_i32 = arith.constant 0 : i32
    %c0_i32_0 = arith.constant 0 : i32
    %c0_i32_1 = arith.constant 0 : i32
    return %arg0, %c0_i32, %c0_i32_0 : i32, i32, i32
  }
  func.func @transform_2(%arg0: i32, %arg1: i32) -> (i32, i32, i32) {
    %c0_i32 = arith.constant 0 : i32
    %c0_i32_0 = arith.constant 0 : i32
    %c0_i32_1 = arith.constant 0 : i32
    return %arg0, %c0_i32, %c0_i32_0 : i32, i32, i32
  }
  func.func @transform_3(%arg0: i32, %arg1: i32) -> (i32, i32, i32) {
    %c0_i32 = arith.constant 0 : i32
    %c0_i32_0 = arith.constant 0 : i32
    return %arg0, %arg1, %c0_i32 : i32, i32, i32
  }
  func.func @transform_4(%arg0: i32, %arg1: i32) -> (i32, i32, i32) {
    %c0_i32 = arith.constant 0 : i32
    %c0_i32_0 = arith.constant 0 : i32
    return %arg0, %arg1, %c0_i32 : i32, i32, i32
  }
  func.func @transform_5(%arg0: i32, %arg1: i32) -> (i32, i32, i32) {
    %c0_i32 = arith.constant 0 : i32
    %c0_i32_0 = arith.constant 0 : i32
    return %arg0, %arg1, %c0_i32 : i32, i32, i32
  }
}

module attributes {stable_mosaic.version = 11 : i64} {
  func.func @_outproj_kernel(%arg0: i32, %arg1: memref<64x32xbf16, #tpu.memory_space<vmem>>, %arg2: memref<32x32xbf16, #tpu.memory_space<vmem>>, %arg3: memref<1x32xf32, #tpu.memory_space<vmem>>, %arg4: memref<64x32xf32, #tpu.memory_space<vmem>>) attributes {dimension_semantics = [#tpu.dimension_semantics<parallel>], iteration_bounds = array<i64: 1>, scalar_prefetch = 0 : i64, scratch_operands = 0 : i64, tpu.core_type = #tpu.core_type<tc>, window_params = [{transform_indices = @transform_0, window_bounds = array<i64: 64, 32>}, {pipeline_mode = #tpu.pipeline_mode<synchronous>, transform_indices = @transform_1, window_bounds = array<i64: 32, 32>}, {pipeline_mode = #tpu.pipeline_mode<synchronous>, transform_indices = @transform_2, window_bounds = array<i64: 1, 32>}, {transform_indices = @transform_3, window_bounds = array<i64: 64, 32>}]} {
    %c0 = arith.constant 0 : index
    %c0_0 = arith.constant 0 : index
    %0 = vector.load %arg1[%c0, %c0_0] : memref<64x32xbf16, #tpu.memory_space<vmem>>, vector<64x32xbf16>
    %c0_1 = arith.constant 0 : index
    %c0_2 = arith.constant 0 : index
    %1 = vector.load %arg2[%c0_1, %c0_2] : memref<32x32xbf16, #tpu.memory_space<vmem>>, vector<32x32xbf16>
    %cst = arith.constant dense<0.000000e+00> : vector<64x32xf32>
    %2 = tpu.matmul %0, %1, %cst {dimension_numbers = #tpu.dot_dimension_numbers<[1], [0], [0], [1], [0, 0, 1, 1], [], []>} : vector<64x32xbf16>, vector<32x32xbf16>, vector<64x32xf32> -> vector<64x32xf32>
    %c0_3 = arith.constant 0 : index
    %c0_4 = arith.constant 0 : index
    %3 = vector.load %arg3[%c0_3, %c0_4] : memref<1x32xf32, #tpu.memory_space<vmem>>, vector<1x32xf32>
    %4 = vector.broadcast %3 : vector<1x32xf32> to vector<64x32xf32>
    %5 = arith.addf %2, %4 : vector<64x32xf32>
    %c0_5 = arith.constant 0 : index
    %c0_6 = arith.constant 0 : index
    %6 = vector.load %arg4[%c0_5, %c0_6] : memref<64x32xf32, #tpu.memory_space<vmem>>, vector<64x32xf32>
    tpu.vector_store %arg4[%c0_5, %c0_6], %5 {strides = array<i32>} : memref<64x32xf32, #tpu.memory_space<vmem>>, vector<64x32xf32>,
    return
  }
  func.func @transform_0(%arg0: i32) -> (i32, i32) {
    %c0_i32 = arith.constant 0 : i32
    %c0_i32_0 = arith.constant 0 : i32
    return %arg0, %c0_i32 : i32, i32
  }
  func.func @transform_1(%arg0: i32) -> (i32, i32) {
    %c0_i32 = arith.constant 0 : i32
    %c0_i32_0 = arith.constant 0 : i32
    %c0_i32_1 = arith.constant 0 : i32
    return %c0_i32, %c0_i32_0 : i32, i32
  }
  func.func @transform_2(%arg0: i32) -> (i32, i32) {
    %c0_i32 = arith.constant 0 : i32
    %c0_i32_0 = arith.constant 0 : i32
    %c0_i32_1 = arith.constant 0 : i32
    return %c0_i32, %c0_i32_0 : i32, i32
  }
  func.func @transform_3(%arg0: i32) -> (i32, i32) {
    %c0_i32 = arith.constant 0 : i32
    %c0_i32_0 = arith.constant 0 : i32
    return %arg0, %c0_i32 : i32, i32
  }
}

</mosaic_0001>

<llo_original>
// kernel: tri_att_start.3
$region0: #{tri_att_start.3}
  #allocation0 [shape = 'u32[]', space=smem, size = 0x4, offset = 0x4, fixed_abs, tag = 'smem constant byte address 0x4 - core index']
  #allocation1 [shape = 'u32[144,128]{1,0:T(1,128)}', space=vmem, size = 0x12000, scoped, tag = 'internal scratch']
  %s0 = inlined_call_operand.vmem [shape: f32[64,32], index: 0, kind: input, shape index: {}]
  %s1 = inlined_call_operand.vmem [shape: f32[1,32], index: 1, kind: input, shape index: {}]
  %s2 = inlined_call_operand.vmem [shape: f32[1,32], index: 2, kind: input, shape index: {}]
  %s3 = inlined_call_operand.vmem [shape: bf16[32,132], index: 3, kind: input, shape index: {}]
  %s4 = inlined_call_operand.vmem [shape: f32[1,132], index: 4, kind: input, shape index: {}]
  %s5 = inlined_call_operand.vmem [shape: bf16[64,128], index: 5, kind: output, shape index: {0}]
  %s6 = inlined_call_operand.vmem [shape: f32[64,4], index: 6, kind: output, shape index: {1}]
  %7 = xla_tuple %s5, %s6
  %s8 = sld [smem:[#allocation0]]
  $region38: #{tri_att_start.3} parent=0
    _
  %s10 = ssub.s32 1, %s8
  %s11 = scalar_select 0, %s10, %s8
  // Predicated region
  $region2: #{tri_att_start.3} parent=0 // pred_check
    _
  $region3: #{tri_att_start.3} parent=0 // pred_check_branch
    %13 = sbr.rel (0) target = $region5
  $region4: #{tri_att_start.3} parent=0 // pred_region
    _
  $region5: #{tri_att_start.3} parent=0 // pred_fallthru
    _
  // Predicated region
  $region6: #{tri_att_start.3} parent=0 // pred_check
    _
  $region7: #{tri_att_start.3} parent=0 // pred_check_branch
    %15 = sbr.rel (0) target = $region9
  $region8: #{tri_att_start.3} parent=0 // pred_region
    _
  $region9: #{tri_att_start.3} parent=0 // pred_fallthru
    _
  // Predicated region
  $region10: #{tri_att_start.3} parent=0 // pred_check
    _
  $region11: #{tri_att_start.3} parent=0 // pred_check_branch
    %17 = sbr.rel (0) target = $region13
  $region12: #{tri_att_start.3} parent=0 // pred_region
    _
  $region13: #{tri_att_start.3} parent=0 // pred_fallthru
    _
  // Predicated region
  $region14: #{tri_att_start.3} parent=0 // pred_check
    _
  $region15: #{tri_att_start.3} parent=0 // pred_check_branch
    %19 = sbr.rel (0) target = $region17
  $region16: #{tri_att_start.3} parent=0 // pred_region
    _
  $region17: #{tri_att_start.3} parent=0 // pred_fallthru
    _
  // Predicated region
  $region18: #{tri_att_start.3} parent=0 // pred_check
    _
  $region19: #{tri_att_start.3} parent=0 // pred_check_branch
    %21 = sbr.rel (0) target = $region21
  $region20: #{tri_att_start.3} parent=0 // pred_region
    _
  $region21: #{tri_att_start.3} parent=0 // pred_fallthru
    _
  %v23 = vld [vmem:[%s0] sm:$0xff]
  %v24 = vld [vmem:[%s0 + $0x8] sm:$0xff]
  %v25 = vld [vmem:[%s0 + $0x10] sm:$0xff]
  %v26 = vld [vmem:[%s0 + $0x18] sm:$0xff]
  %v27 = vld [vmem:[%s0 + $0x20] sm:$0xff]
  %v28 = vld [vmem:[%s0 + $0x28] sm:$0xff]
  %v29 = vld [vmem:[%s0 + $0x30] sm:$0xff]
  %v30 = vld [vmem:[%s0 + $0x38] sm:$0xff]
  %vm31 = vcmask 261120
  %v32 = vsel %vm31, %v23, 0.0
  %33 = vadd.xlane.f32.xlu0 %v32
  %v34 = vpop.xlane.xlu0 %33
  %v35 = vsel %vm31, %v24, 0.0
  %36 = vadd.xlane.f32.xlu0 %v35
  %v37 = vpop.xlane.xlu0 %36
  %v38 = vsel %vm31, %v25, 0.0
  %39 = vadd.xlane.f32.xlu0 %v38
  %v40 = vpop.xlane.xlu0 %39
  %v41 = vsel %vm31, %v26, 0.0
  %42 = vadd.xlane.f32.xlu0 %v41
  %v43 = vpop.xlane.xlu0 %42
  %v44 = vsel %vm31, %v27, 0.0
  %45 = vadd.xlane.f32.xlu0 %v44
  %v46 = vpop.xlane.xlu0 %45
  %v47 = vsel %vm31, %v28, 0.0
  %48 = vadd.xlane.f32.xlu0 %v47
  %v49 = vpop.xlane.xlu0 %48
  %v50 = vsel %vm31, %v29, 0.0
  %51 = vadd.xlane.f32.xlu0 %v50
  %v52 = vpop.xlane.xlu0 %51
  %v53 = vsel %vm31, %v30, 0.0
  %54 = vadd.xlane.f32.xlu0 %v53
  %v55 = vpop.xlane.xlu0 %54
  %v56 = vrcp.pop 32.0
  %v57 = vmul.f32 %v34, %v56
  %v58 = vmul.f32 %v37, %v56
  %v59 = vmul.f32 %v40, %v56
  %v60 = vmul.f32 %v43, %v56
  %v61 = vmul.f32 %v46, %v56
  %v62 = vmul.f32 %v49, %v56
  %v63 = vmul.f32 %v52, %v56
  %v64 = vmul.f32 %v55, %v56
  %v65 = vsub.f32 %v23, %v57
  %v66 = vsub.f32 %v24, %v58
  %v67 = vsub.f32 %v25, %v59
  %v68 = vsub.f32 %v26, %v60
  %v69 = vsub.f32 %v27, %v61
  %v70 = vsub.f32 %v28, %v62
  %v71 = vsub.f32 %v29, %v63
  %v72 = vsub.f32 %v30, %v64
  %v73 = vmul.f32 %v65, %v65
  %v74 = vmul.f32 %v66, %v66
  %v75 = vmul.f32 %v67, %v67
  %v76 = vmul.f32 %v68, %v68
  %v77 = vmul.f32 %v69, %v69
  %v78 = vmul.f32 %v70, %v70
  %v79 = vmul.f32 %v71, %v71
  %v80 = vmul.f32 %v72, %v72
  %v81 = vsel %vm31, %v73, 0.0
  %82 = vadd.xlane.f32.xlu0 %v81
  %v83 = vpop.xlane.xlu0 %82
  %v84 = vsel %vm31, %v74, 0.0
  %85 = vadd.xlane.f32.xlu0 %v84
  %v86 = vpop.xlane.xlu0 %85
  %v87 = vsel %vm31, %v75, 0.0
  %88 = vadd.xlane.f32.xlu0 %v87
  %v89 = vpop.xlane.xlu0 %88
  %v90 = vsel %vm31, %v76, 0.0
  %91 = vadd.xlane.f32.xlu0 %v90
  %v92 = vpop.xlane.xlu0 %91
  %v93 = vsel %vm31, %v77, 0.0
  %94 = vadd.xlane.f32.xlu0 %v93
  %v95 = vpop.xlane.xlu0 %94
  %v96 = vsel %vm31, %v78, 0.0
  %97 = vadd.xlane.f32.xlu0 %v96
  %v98 = vpop.xlane.xlu0 %97
  %v99 = vsel %vm31, %v79, 0.0
  %100 = vadd.xlane.f32.xlu0 %v99
  %v101 = vpop.xlane.xlu0 %100
  %v102 = vsel %vm31, %v80, 0.0
  %103 = vadd.xlane.f32.xlu0 %v102
  %v104 = vpop.xlane.xlu0 %103
  %v105 = vmul.f32 %v83, %v56
  %v106 = vmul.f32 %v86, %v56
  %v107 = vmul.f32 %v89, %v56
  %v108 = vmul.f32 %v92, %v56
  %v109 = vmul.f32 %v95, %v56
  %v110 = vmul.f32 %v98, %v56
  %v111 = vmul.f32 %v101, %v56
  %v112 = vmul.f32 %v104, %v56
  %v113 = vadd.f32 %v105, 1e-05
  %v114 = vadd.f32 %v106, 1e-05
  %v115 = vadd.f32 %v107, 1e-05
  %v116 = vadd.f32 %v108, 1e-05
  %v117 = vadd.f32 %v109, 1e-05
  %v118 = vadd.f32 %v110, 1e-05
  %v119 = vadd.f32 %v111, 1e-05
  %v120 = vadd.f32 %v112, 1e-05
  %v121 = vrsqrt.pop %v113
  %v122 = vrsqrt.pop %v114
  %v123 = vrsqrt.pop %v115
  %v124 = vrsqrt.pop %v116
  %v125 = vrsqrt.pop %v117
  %v126 = vrsqrt.pop %v118
  %v127 = vrsqrt.pop %v119
  %v128 = vrsqrt.pop %v120
  %v129 = vmul.f32 %v65, %v121
  %v130 = vmul.f32 %v66, %v122
  %v131 = vmul.f32 %v67, %v123
  %v132 = vmul.f32 %v68, %v124
  %v133 = vmul.f32 %v69, %v125
  %v134 = vmul.f32 %v70, %v126
  %v135 = vmul.f32 %v71, %v127
  %v136 = vmul.f32 %v72, %v128
  %v137 = vld [vmem:[%s1] sm:$0x1]
  %v139 = vlaneseq
  %v140 = vshrl.u32 %v139, 7
  %v141 = vsub.s32 0, %v140
  %v142 = vrot.slane %v137, %v141
  %v144 = vmul.f32 %v129, %v142
  %v145 = vmul.f32 %v130, %v142
  %v146 = vmul.f32 %v131, %v142
  %v147 = vmul.f32 %v132, %v142
  %v148 = vmul.f32 %v133, %v142
  %v149 = vmul.f32 %v134, %v142
  %v150 = vmul.f32 %v135, %v142
  %v151 = vmul.f32 %v136, %v142
  %v152 = vld [vmem:[%s2] sm:$0x1]
  %v154 = vlaneseq
  %v155 = vshrl.u32 %v154, 7
  %v156 = vsub.s32 0, %v155
  %v157 = vrot.slane %v152, %v156
  %v159 = vadd.f32 %v144, %v157
  %v160 = vadd.f32 %v145, %v157
  %v161 = vadd.f32 %v146, %v157
  %v162 = vadd.f32 %v147, %v157
  %v163 = vadd.f32 %v148, %v157
  %v164 = vadd.f32 %v149, %v157
  %v165 = vadd.f32 %v150, %v157
  %v166 = vadd.f32 %v151, %v157
  %v167 = vpack.c.bf16 %v160, %v159
  %v168 = vpack.c.bf16 %v162, %v161
  %v169 = vpack.c.bf16 %v164, %v163
  %v170 = vpack.c.bf16 %v166, %v165
  %v171 = vld [vmem:[%s3] sm:$0xff]
  %v172 = vld [vmem:[%s3 + $0x8] sm:$0xff]
  %v173 = vld [vmem:[%s3 + $0x10] sm:$0xff]
  %v174 = vld [vmem:[%s3 + $0x18] sm:$0xff]
  %v175 = vld [vmem:[%s4] sm:$0x3]
  %v177 = vlaneseq
  %v178 = vshrl.u32 %v177, 7
  %v179 = vsub.s32 0, %v178
  %v180 = vrot.slane %v175, %v179
  %v181 = vlaneseq
  %v182 = vshrl.u32 %v181, 7
  %v183 = vsub.s32 1, %v182
  %v184 = vrot.slane %v175, %v183
  %v191 = vunpack.c.l.b16 %v171
  %v192 = vunpack.c.h.b16 %v171
  %v193 = vunpack.c.l.b16 %v172
  %v194 = vunpack.c.h.b16 %v172
  %v195 = vunpack.c.l.b16 %v173
  %v196 = vunpack.c.h.b16 %v173
  %v197 = vunpack.c.l.b16 %v174
  %v198 = vunpack.c.h.b16 %v174
  %v199 = vpack.c.b16 %v193, %v191
  %v200 = vpack.c.b16 %v194, %v192
  %v201 = vpack.c.b16 %v197, %v195
  %v202 = vpack.c.b16 %v198, %v196
  %v208 = vsel %vm31, %v167, 0
  %v211 = vsel %vm31, %v168, 0
  %v214 = vsel %vm31, %v169, 0
  %v217 = vsel %vm31, %v170, 0
  %219 = vmatprep.subr.bf16.mxu0 0
  %220 = vmatpush1.bf16.msra.mxu0 0
  %221 = vmatprep.subr.bf16.mxu0 0
  %222 = vmatpush1.bf16.msra.mxu0 0
  %223 = vmatprep.subr.bf16.mxu0 0
  %224 = vmatpush1.bf16.msra.mxu0 0
  %225 = vmatprep.subr.bf16.mxu0 0
  %226 = vmatpush1.bf16.msra.mxu0 0
  %227 = vmatprep.subr.bf16.mxu0 0
  %228 = vmatpush1.bf16.msra.mxu0 0
  %229 = vmatprep.subr.bf16.mxu0 0
  %230 = vmatpush1.bf16.msra.mxu0 0
  %231 = vmatprep.subr.bf16.mxu0 %v202
  %232 = vmatpush1.bf16.msra.mxu0 %v201
  %233 = vmatprep.subr.bf16.mxu0 %v200
  %234 = vmatpush1.bf16.msra.mxu0 %v199
  %235 = vmatprep.subr.bf16.mxu0 0
  %236 = vmatpush2.bf16.msra.mxu0 0
  %237 = vmatprep.subr.bf16.mxu0 0
  %238 = vmatpush2.bf16.msra.mxu0 0
  %239 = vmatprep.subr.bf16.mxu0 0
  %240 = vmatpush2.bf16.msra.mxu0 0
  %241 = vmatprep.subr.bf16.mxu0 0
  %242 = vmatpush2.bf16.msra.mxu0 0
  %243 = vmatprep.subr.bf16.mxu0 0
  %244 = vmatpush2.bf16.msra.mxu0 0
  %245 = vmatprep.subr.bf16.mxu0 0
  %246 = vmatpush2.bf16.msra.mxu0 0
  %247 = vmatprep.subr.bf16.mxu0 0
  %248 = vmatpush2.bf16.msra.mxu0 0
  %249 = vmatprep.subr.bf16.mxu0 0
  %250 = vmatpush2.bf16.msra.mxu0 0
  %251 = vmatprep.mubr.bf16.mxu0 0
  %252 = vmatmul.mubr.bf16.gmra.mxu0 %v208
  %v253 = vpop.f32.mrf.mxu0
  %v254 = vadd.f32 %v180, %v253
  %v255 = vpop.f32.mrf.mxu0
  %v256 = vadd.f32 %v184, %v255
  %v257 = vpop.f32.mrf.mxu0
  %v258 = vadd.f32 %v180, %v257
  %v259 = vpop.f32.mrf.mxu0
  %v260 = vadd.f32 %v184, %v259
  %261 = vmatprep.mubr.bf16.mxu0 0
  %262 = vmatmul.mubr.bf16.gmra.mxu0 %v211
  %v263 = vpop.f32.mrf.mxu0
  %v264 = vadd.f32 %v180, %v263
  %v265 = vpop.f32.mrf.mxu0
  %v266 = vadd.f32 %v184, %v265
  %v267 = vpop.f32.mrf.mxu0
  %v268 = vadd.f32 %v180, %v267
  %v269 = vpop.f32.mrf.mxu0
  %v270 = vadd.f32 %v184, %v269
  %271 = vmatprep.mubr.bf16.mxu0 0
  %272 = vmatmul.mubr.bf16.gmra.mxu0 %v214
  %v273 = vpop.f32.mrf.mxu0
  %v274 = vadd.f32 %v180, %v273
  %v275 = vpop.f32.mrf.mxu0
  %v276 = vadd.f32 %v184, %v275
  %v277 = vpop.f32.mrf.mxu0
  %v278 = vadd.f32 %v180, %v277
  %v279 = vpop.f32.mrf.mxu0
  %v280 = vadd.f32 %v184, %v279
  %281 = vmatprep.mubr.bf16.mxu0 0
  %282 = vmatmul.mubr.bf16.gmra.mxu0 %v217
  %v283 = vpop.f32.mrf.mxu0
  %v284 = vadd.f32 %v180, %v283
  %v285 = vpop.f32.mrf.mxu0
  %v286 = vadd.f32 %v184, %v285
  %v287 = vpop.f32.mrf.mxu0
  %v288 = vadd.f32 %v180, %v287
  %v289 = vpop.f32.mrf.mxu0
  %v290 = vadd.f32 %v184, %v289
  %291 = vdwg.mxu0
  %v292 = vlaneseq
  %v293 = vand.u32 %v292, 127
  %vm294 = vcmp.ge.s32.totalorder %v293, 96
  %v295 = vxor.u32 %v254, 2147483648
  %v296 = vxor.u32 %v258, 2147483648
  %v297 = vxor.u32 %v264, 2147483648
  %v298 = vxor.u32 %v268, 2147483648
  %v299 = vxor.u32 %v274, 2147483648
  %v300 = vxor.u32 %v278, 2147483648
  %v301 = vxor.u32 %v284, 2147483648
  %v302 = vxor.u32 %v288, 2147483648
  %v303 = vmul.f32 %v295, 1.442695
  %v304 = vpow.pop %v303
  %v305 = vmul.f32 %v296, 1.442695
  %v306 = vpow.pop %v305
  %v307 = vmul.f32 %v297, 1.442695
  %v308 = vpow.pop %v307
  %v309 = vmul.f32 %v298, 1.442695
  %v310 = vpow.pop %v309
  %v311 = vmul.f32 %v299, 1.442695
  %v312 = vpow.pop %v311
  %v313 = vmul.f32 %v300, 1.442695
  %v314 = vpow.pop %v313
  %v315 = vmul.f32 %v301, 1.442695
  %v316 = vpow.pop %v315
  %v317 = vmul.f32 %v302, 1.442695
  %v318 = vpow.pop %v317
  %v319 = vadd.f32 %v304, 1.0
  %v320 = vadd.f32 %v306, 1.0
  %v321 = vadd.f32 %v308, 1.0
  %v322 = vadd.f32 %v310, 1.0
  %v323 = vadd.f32 %v312, 1.0
  %v324 = vadd.f32 %v314, 1.0
  %v325 = vadd.f32 %v316, 1.0
  %v326 = vadd.f32 %v318, 1.0
  %v327 = vrcp.pop %v319
  %v328 = vmul.f32 1.0, %v327
  %v329 = vrcp.pop %v320
  %v330 = vmul.f32 1.0, %v329
  %v331 = vrcp.pop %v321
  %v332 = vmul.f32 1.0, %v331
  %v333 = vrcp.pop %v322
  %v334 = vmul.f32 1.0, %v333
  %v335 = vrcp.pop %v323
  %v336 = vmul.f32 1.0, %v335
  %v337 = vrcp.pop %v324
  %v338 = vmul.f32 1.0, %v337
  %v339 = vrcp.pop %v325
  %v340 = vmul.f32 1.0, %v339
  %v341 = vrcp.pop %v326
  %v342 = vmul.f32 1.0, %v341
  %v343 = vsel %vm294, %v328, %v254
  %v344 = vsel %vm294, %v330, %v258
  %v345 = vsel %vm294, %v332, %v264
  %v346 = vsel %vm294, %v334, %v268
  %v347 = vsel %vm294, %v336, %v274
  %v348 = vsel %vm294, %v338, %v278
  %v349 = vsel %vm294, %v340, %v284
  %v350 = vsel %vm294, %v342, %v288
  %v351 = vpack.c.bf16 %v344, %v343
  %v352 = vpack.c.bf16 %v346, %v345
  %v353 = vpack.c.bf16 %v348, %v347
  %v354 = vpack.c.bf16 %v350, %v349
  %v359 = vunpack.c.l.b16 %v351
  %v360 = vunpack.c.h.b16 %v351
  %v361 = vunpack.c.l.b16 %v352
  %v362 = vunpack.c.h.b16 %v352
  %v363 = vunpack.c.l.b16 %v353
  %v364 = vunpack.c.h.b16 %v353
  %v365 = vunpack.c.l.b16 %v354
  %v366 = vunpack.c.h.b16 %v354
  %v367 = vpack.c.b16 %v359, %v359
  %v368 = vpack.c.b16 %v360, %v360
  %v369 = vpack.c.b16 %v361, %v361
  %v370 = vpack.c.b16 %v362, %v362
  %v371 = vpack.c.b16 %v363, %v363
  %v372 = vpack.c.b16 %v364, %v364
  %v373 = vpack.c.b16 %v365, %v365
  %v374 = vpack.c.b16 %v366, %v366
  %383 = vst [vmem:[%s5] sm:$0xf] %v367
  %384 = vst [vmem:[%s5 + $0x4] sm:$0xf] %v368
  %385 = vst [vmem:[%s5 + $0x8] sm:$0xf] %v369
  %386 = vst [vmem:[%s5 + $0xc] sm:$0xf] %v370
  %387 = vst [vmem:[%s5 + $0x10] sm:$0xf] %v371
  %388 = vst [vmem:[%s5 + $0x14] sm:$0xf] %v372
  %389 = vst [vmem:[%s5 + $0x18] sm:$0xf] %v373
  %390 = vst [vmem:[%s5 + $0x1c] sm:$0xf] %v374
  %vm391 = vcmask 31744
  %392 = vst.msk [vmem:[%s6] sm:$0xff] %vm391, %v256
  %393 = vst.msk [vmem:[%s6 + $0x8] sm:$0xff] %vm391, %v260
  %394 = vst.msk [vmem:[%s6 + $0x10] sm:$0xff] %vm391, %v266
  %395 = vst.msk [vmem:[%s6 + $0x18] sm:$0xff] %vm391, %v270
  %396 = vst.msk [vmem:[%s6 + $0x20] sm:$0xff] %vm391, %v276
  %397 = vst.msk [vmem:[%s6 + $0x28] sm:$0xff] %vm391, %v280
  %398 = vst.msk [vmem:[%s6 + $0x30] sm:$0xff] %vm391, %v286
  %399 = vst.msk [vmem:[%s6 + $0x38] sm:$0xff] %vm391, %v290
  // Predicated region
  $region22: #{tri_att_start.3} parent=0 // pred_check
    _
  $region23: #{tri_att_start.3} parent=0 // pred_check_branch
    %401 = sbr.rel (0) target = $region25
  $region24: #{tri_att_start.3} parent=0 // pred_region
    _
  $region25: #{tri_att_start.3} parent=0 // pred_fallthru
    _
  // Predicated region
  $region26: #{tri_att_start.3} parent=0 // pred_check
    _
  $region27: #{tri_att_start.3} parent=0 // pred_check_branch
    %403 = sbr.rel (0) target = $region29
  $region28: #{tri_att_start.3} parent=0 // pred_region
    _
  $region29: #{tri_att_start.3} parent=0 // pred_fallthru
    _
  // Predicated region
  $region30: #{tri_att_start.3} parent=0 // pred_check
    _
  $region31: #{tri_att_start.3} parent=0 // pred_check_branch
    %405 = sbr.rel (0) target = $region33
  $region32: #{tri_att_start.3} parent=0 // pred_region
    _
  $region33: #{tri_att_start.3} parent=0 // pred_fallthru
    _
  // Predicated region
  $region34: #{tri_att_start.3} parent=0 // pred_check
    _
  $region35: #{tri_att_start.3} parent=0 // pred_check_branch
    %407 = sbr.rel (0) target = $region37
  $region36: #{tri_att_start.3} parent=0 // pred_region
    _
  $region37: #{tri_att_start.3} parent=0 // pred_fallthru
    _

// kernel: tri_att_start.4
$region0: #{tri_att_start.4}
  #allocation0 [shape = 'u32[]', space=smem, size = 0x4, offset = 0x4, fixed_abs, tag = 'smem constant byte address 0x4 - core index']
  #allocation1 [shape = 'u32[144,128]{1,0:T(1,128)}', space=vmem, size = 0x12000, scoped, tag = 'internal scratch']
  %s0 = inlined_call_operand.vmem [shape: bf16[4,8,64], index: 0, kind: input, shape index: {}]
  %s1 = inlined_call_operand.vmem [shape: bf16[4,64,8], index: 1, kind: input, shape index: {}]
  %s2 = inlined_call_operand.vmem [shape: bf16[4,8,64], index: 2, kind: input, shape index: {}]
  %s3 = inlined_call_operand.vmem [shape: bf16[4,8,64], index: 3, kind: input, shape index: {}]
  %s4 = inlined_call_operand.vmem [shape: f32[4,8,8], index: 4, kind: input, shape index: {}]
  %s5 = inlined_call_operand.vmem [shape: bf16[4,8,64], index: 5, kind: output, shape index: {}]
  %s6 = sld [smem:[#allocation0]]
  $region53: #{tri_att_start.4} parent=0
    _
  %s8 = ssub.s32 1, %s6
  %s9 = scalar_select 0, %s8, %s6
  loop: start=0, step=1, limit=6
  $region2: #{tri_att_start.4} parent=0 // loop_pre_header
    _
  $region3: #{tri_att_start.4} parent=0 // loop_header
    %s11 = sphi 0, %s15
    %p12 = scmp.ge.s32.totalorder %s11, 6
    %s18 = sphi 0, %s30
    %s19 = sphi 0, %s26
    %s20 = sphi 0, %s18
    %s21 = sphi 0, %s19
    %s22 = sphi 0, %s20
    %s23 = sphi 0, %s21
    %s35 = sphi 0, %s37
    %s38 = sphi 0, %s35
    %s39 = sphi 0, %s38
    %s55 = sphi 0, %s39
    %s61 = sphi 0, %s63
    %s64 = sphi 0, %s61
    %s65 = sphi 0, %s64
    %s81 = sphi 0, %s65
    %s87 = sphi 0, %s89
    %s90 = sphi 0, %s87
    %s91 = sphi 0, %s90
    %s107 = sphi 0, %s91
    %s115 = sphi 0, %s117
    %s118 = sphi 0, %s115
    %s119 = sphi 0, %s118
    %s135 = sphi 0, %s119
    %s143 = sphi 0, %s145
    %s146 = sphi 0, %s143
    %s147 = sphi 0, %s146
    %s163 = sphi 0, %s147
    %s171 = sphi 0, %s173
    %s174 = sphi 0, %s171
    %s175 = sphi 0, %s174
    %s191 = sphi 0, %s175
  $region4: #{tri_att_start.4} parent=0 // loop_header_branch
    %14 = sbr.rel (%p12) target = $region8
  $region5: #{tri_att_start.4} parent=0 // loop_body
    %s16 = ssub.s32 %s11, 1
    %s17 = ssub.s32 %s11, 2
    %s24 = sadd.s32 1, %s19
    %p25 = scmp.ge.s32.totalorder %s24, 1
    %s26 = scalar_select %p25, 0, %s24
    %s27 = sadd.s32 1, %s18
    %s28 = scalar_select %p25, %s27, %s18
    %p29 = scmp.ge.s32.totalorder %s28, 4
    %s30 = scalar_select %p29, 0, %s28
    %s31 = ssub.s32 %s18, %s30
    %s32 = ssub.s32 %s19, %s26
    %s33 = sor.u32 %s31, %s32
    %p34 = scmp.eq.s32.totalorder %s33, 0
    %s36 = sadd.s32 %s35, 1
    %s37 = scalar_select %p34, %s35, %s36
    %p40 = pneg %p34
    %p41 = scmp.eq.s32.totalorder %s11, 3
    %p42 = por %p40, %p41
    %p43 = scmp.ne.s32.totalorder %s35, %s38
    %p44 = scmp.eq.s32.totalorder %s11, 0
    %p45 = por %p43, %p44
    %p46 = scmp.ne.s32.totalorder %s35, %s38
    %p47 = scmp.eq.s32.totalorder %s16, 3
    %p48 = por %p46, %p47
    %p49 = scmp.ne.s32.totalorder %s38, %s39
    %p50 = scmp.eq.s32.totalorder %s16, 0
    %p51 = por %p49, %p50
    %p52 = scmp.ne.s32.totalorder %s38, %s39
    %p53 = scmp.eq.s32.totalorder %s17, 3
    %p54 = por %p52, %p53
    %p56 = scmp.ne.s32.totalorder %s39, %s55
    %p57 = scmp.eq.s32.totalorder %s17, 0
    %p58 = por %p56, %p57
    %s59 = ssub.s32 %s18, %s30
    %p60 = scmp.eq.s32.totalorder %s59, 0
    %s62 = sadd.s32 %s61, 1
    %s63 = scalar_select %p60, %s61, %s62
    %p66 = pneg %p60
    %p67 = scmp.eq.s32.totalorder %s11, 3
    %p68 = por %p66, %p67
    %p69 = scmp.ne.s32.totalorder %s61, %s64
    %p70 = scmp.eq.s32.totalorder %s11, 0
    %p71 = por %p69, %p70
    %p72 = scmp.ne.s32.totalorder %s61, %s64
    %p73 = scmp.eq.s32.totalorder %s16, 3
    %p74 = por %p72, %p73
    %p75 = scmp.ne.s32.totalorder %s64, %s65
    %p76 = scmp.eq.s32.totalorder %s16, 0
    %p77 = por %p75, %p76
    %p78 = scmp.ne.s32.totalorder %s64, %s65
    %p79 = scmp.eq.s32.totalorder %s17, 3
    %p80 = por %p78, %p79
    %p82 = scmp.ne.s32.totalorder %s65, %s81
    %p83 = scmp.eq.s32.totalorder %s17, 0
    %p84 = por %p82, %p83
    %s85 = ssub.s32 %s18, %s30
    %p86 = scmp.eq.s32.totalorder %s85, 0
    %s88 = sadd.s32 %s87, 1
    %s89 = scalar_select %p86, %s87, %s88
    %p92 = pneg %p86
    %p93 = scmp.eq.s32.totalorder %s11, 3
    %p94 = por %p92, %p93
    %p95 = scmp.ne.s32.totalorder %s87, %s90
    %p96 = scmp.eq.s32.totalorder %s11, 0
    %p97 = por %p95, %p96
    %p98 = scmp.ne.s32.totalorder %s87, %s90
    %p99 = scmp.eq.s32.totalorder %s16, 3
    %p100 = por %p98, %p99
    %p101 = scmp.ne.s32.totalorder %s90, %s91
    %p102 = scmp.eq.s32.totalorder %s16, 0
    %p103 = por %p101, %p102
    %p104 = scmp.ne.s32.totalorder %s90, %s91
    %p105 = scmp.eq.s32.totalorder %s17, 3
    %p106 = por %p104, %p105
    %p108 = scmp.ne.s32.totalorder %s91, %s107
    %p109 = scmp.eq.s32.totalorder %s17, 0
    %p110 = por %p108, %p109
    %s111 = ssub.s32 %s18, %s30
    %s112 = ssub.s32 %s19, %s26
    %s113 = sor.u32 %s111, %s112
    %p114 = scmp.eq.s32.totalorder %s113, 0
    %s116 = sadd.s32 %s115, 1
    %s117 = scalar_select %p114, %s115, %s116
    %p120 = pneg %p114
    %p121 = scmp.eq.s32.totalorder %s11, 3
    %p122 = por %p120, %p121
    %p123 = scmp.ne.s32.totalorder %s115, %s118
    %p124 = scmp.eq.s32.totalorder %s11, 0
    %p125 = por %p123, %p124
    %p126 = scmp.ne.s32.totalorder %s115, %s118
    %p127 = scmp.eq.s32.totalorder %s16, 3
    %p128 = por %p126, %p127
    %p129 = scmp.ne.s32.totalorder %s118, %s119
    %p130 = scmp.eq.s32.totalorder %s16, 0
    %p131 = por %p129, %p130
    %p132 = scmp.ne.s32.totalorder %s118, %s119
    %p133 = scmp.eq.s32.totalorder %s17, 3
    %p134 = por %p132, %p133
    %p136 = scmp.ne.s32.totalorder %s119, %s135
    %p137 = scmp.eq.s32.totalorder %s17, 0
    %p138 = por %p136, %p137
    %s139 = ssub.s32 %s18, %s30
    %s140 = ssub.s32 %s19, %s26
    %s141 = sor.u32 %s139, %s140
    %p142 = scmp.eq.s32.totalorder %s141, 0
    %s144 = sadd.s32 %s143, 1
    %s145 = scalar_select %p142, %s143, %s144
    %p148 = pneg %p142
    %p149 = scmp.eq.s32.totalorder %s11, 3
    %p150 = por %p148, %p149
    %p151 = scmp.ne.s32.totalorder %s143, %s146
    %p152 = scmp.eq.s32.totalorder %s11, 0
    %p153 = por %p151, %p152
    %p154 = scmp.ne.s32.totalorder %s143, %s146
    %p155 = scmp.eq.s32.totalorder %s16, 3
    %p156 = por %p154, %p155
    %p157 = scmp.ne.s32.totalorder %s146, %s147
    %p158 = scmp.eq.s32.totalorder %s16, 0
    %p159 = por %p157, %p158
    %p160 = scmp.ne.s32.totalorder %s146, %s147
    %p161 = scmp.eq.s32.totalorder %s17, 3
    %p162 = por %p160, %p161
    %p164 = scmp.ne.s32.totalorder %s147, %s163
    %p165 = scmp.eq.s32.totalorder %s17, 0
    %p166 = por %p164, %p165
    %s167 = ssub.s32 %s18, %s30
    %s168 = ssub.s32 %s19, %s26
    %s169 = sor.u32 %s167, %s168
    %p170 = scmp.eq.s32.totalorder %s169, 0
    %s172 = sadd.s32 %s171, 1
    %s173 = scalar_select %p170, %s171, %s172
    %p176 = pneg %p170
    %p177 = scmp.eq.s32.totalorder %s11, 3
    %p178 = por %p176, %p177
    %p179 = scmp.ne.s32.totalorder %s171, %s174
    %p180 = scmp.eq.s32.totalorder %s11, 0
    %p181 = por %p179, %p180
    %p182 = scmp.ne.s32.totalorder %s171, %s174
    %p183 = scmp.eq.s32.totalorder %s16, 3
    %p184 = por %p182, %p183
    %p185 = scmp.ne.s32.totalorder %s174, %s175
    %p186 = scmp.eq.s32.totalorder %s16, 0
    %p187 = por %p185, %p186
    %p188 = scmp.ne.s32.totalorder %s174, %s175
    %p189 = scmp.eq.s32.totalorder %s17, 3
    %p190 = por %p188, %p189
    %p192 = scmp.ne.s32.totalorder %s175, %s191
    %p193 = scmp.eq.s32.totalorder %s17, 0
    %p194 = por %p192, %p193
    %p195 = scmp.le.s32.totalorder 1, %s11
    %p196 = scmp.lt.s32.totalorder %s11, 5
    %p197 = pnand %p195, %p196
    %p198 = pneg %p197
    // Predicated region
    $region9: #{tri_att_start.4} parent=5 // pred_check
      _
    $region10: #{tri_att_start.4} parent=5 // pred_check_branch
      %200 = sbr.rel (%p197) target = $region12
    $region11: #{tri_att_start.4} parent=5 // pred_region
      %s201 = ssub.s32 %s11, 1
    $region12: #{tri_att_start.4} parent=5 // pred_fallthru
      _
    %p202 = scmp.lt.s32.totalorder %s11, 4
    // Predicated region
    $region13: #{tri_att_start.4} parent=5 // pred_check
      %p203 = pneg %p202
    $region14: #{tri_att_start.4} parent=5 // pred_check_branch
      %205 = sbr.rel (%p203) target = $region16
    $region15: #{tri_att_start.4} parent=5 // pred_region
      // Predicated region
      $region17: #{tri_att_start.4} parent=15 // pred_check
        %p206 = pneg %p45
      $region18: #{tri_att_start.4} parent=15 // pred_check_branch
        %208 = sbr.rel (%p206) target = $region20
      $region19: #{tri_att_start.4} parent=15 // pred_region
        %p209 = scmp.lt.s32.totalorder %s18, 3
        %s210 = scalar_select %p209, %s18, 3
        %p211 = scmp.lt.s32.totalorder %s19, 0
        %s212 = scalar_select %p211, %s19, 0
        %s213 = sadd.s32 %s212, %s210
        %s214 = smul.addr %s213, 4
        %s215 = scalar_lea.vmem %s0, %s214
      $region20: #{tri_att_start.4} parent=15 // pred_fallthru
        _
      // Predicated region
      $region21: #{tri_att_start.4} parent=15 // pred_check
        %p216 = pneg %p71
      $region22: #{tri_att_start.4} parent=15 // pred_check_branch
        %218 = sbr.rel (%p216) target = $region24
      $region23: #{tri_att_start.4} parent=15 // pred_region
        %p219 = scmp.lt.s32.totalorder %s18, 3
        %s220 = scalar_select %p219, %s18, 3
        %s221 = smul.addr %s220, 8
        %s222 = smul.addr %s221, 4
        %s223 = scalar_lea.vmem %s1, %s222
      $region24: #{tri_att_start.4} parent=15 // pred_fallthru
        _
      // Predicated region
      $region25: #{tri_att_start.4} parent=15 // pred_check
        %p224 = pneg %p97
      $region26: #{tri_att_start.4} parent=15 // pred_check_branch
        %226 = sbr.rel (%p224) target = $region28
      $region27: #{tri_att_start.4} parent=15 // pred_region
        %p227 = scmp.lt.s32.totalorder %s18, 3
        %s228 = scalar_select %p227, %s18, 3
        %s229 = smul.addr %s228, 4
        %s230 = scalar_lea.vmem %s2, %s229
      $region28: #{tri_att_start.4} parent=15 // pred_fallthru
        _
      // Predicated region
      $region29: #{tri_att_start.4} parent=15 // pred_check
        %p231 = pneg %p125
      $region30: #{tri_att_start.4} parent=15 // pred_check_branch
        %233 = sbr.rel (%p231) target = $region32
      $region31: #{tri_att_start.4} parent=15 // pred_region
        %p234 = scmp.lt.s32.totalorder %s18, 3
        %s235 = scalar_select %p234, %s18, 3
        %p236 = scmp.lt.s32.totalorder %s19, 0
        %s237 = scalar_select %p236, %s19, 0
        %s238 = sadd.s32 %s237, %s235
        %s239 = smul.addr %s238, 4
        %s240 = scalar_lea.vmem %s3, %s239
      $region32: #{tri_att_start.4} parent=15 // pred_fallthru
        _
      // Predicated region
      $region33: #{tri_att_start.4} parent=15 // pred_check
        %p241 = pneg %p153
      $region34: #{tri_att_start.4} parent=15 // pred_check_branch
        %243 = sbr.rel (%p241) target = $region36
      $region35: #{tri_att_start.4} parent=15 // pred_region
        %p244 = scmp.lt.s32.totalorder %s18, 3
        %s245 = scalar_select %p244, %s18, 3
        %p246 = scmp.lt.s32.totalorder %s19, 0
        %s247 = scalar_select %p246, %s19, 0
        %s248 = sadd.s32 %s247, %s245
        %s249 = smul.addr %s248, 8
        %s250 = scalar_lea.vmem %s4, %s249
      $region36: #{tri_att_start.4} parent=15 // pred_fallthru
        _
    $region16: #{tri_att_start.4} parent=5 // pred_fallthru
      _
    %p251 = scmp.le.s32.totalorder 1, %s11
    %p252 = scmp.lt.s32.totalorder %s11, 5
    %p253 = pnand %p251, %p252
    %p254 = pneg %p253
    // Predicated region
    $region37: #{tri_att_start.4} parent=5 // pred_check
      _
    $region38: #{tri_att_start.4} parent=5 // pred_check_branch
      %256 = sbr.rel (%p253) target = $region40
    $region39: #{tri_att_start.4} parent=5 // pred_region
      %s257 = ssub.s32 %s11, 1
      %p258 = scmp.lt.s32.totalorder %s20, 3
      %s259 = scalar_select %p258, %s20, 3
      %p260 = scmp.lt.s32.totalorder %s21, 0
      %s261 = scalar_select %p260, %s21, 0
      %s262 = sadd.s32 %s261, %s259
      %s263 = smul.addr %s262, 4
      %s264 = scalar_lea.vmem %s0, %s263
      %p265 = pneg %p51
      %p266 = pneg %p48
      %p267 = scmp.lt.s32.totalorder %s20, 3
      %s268 = scalar_select %p267, %s20, 3
      %s269 = smul.addr %s268, 8
      %s270 = smul.addr %s269, 4
      %s271 = scalar_lea.vmem %s1, %s270
      %p272 = pneg %p77
      %p273 = pneg %p74
      %p274 = scmp.lt.s32.totalorder %s20, 3
      %s275 = scalar_select %p274, %s20, 3
      %s276 = smul.addr %s275, 4
      %s277 = scalar_lea.vmem %s2, %s276
      %p278 = pneg %p103
      %p279 = pneg %p100
      %p280 = scmp.lt.s32.totalorder %s20, 3
      %s281 = scalar_select %p280, %s20, 3
      %p282 = scmp.lt.s32.totalorder %s21, 0
      %s283 = scalar_select %p282, %s21, 0
      %s284 = sadd.s32 %s283, %s281
      %s285 = smul.addr %s284, 4
      %s286 = scalar_lea.vmem %s3, %s285
      %p287 = pneg %p131
      %p288 = pneg %p128
      %p289 = scmp.lt.s32.totalorder %s20, 3
      %s290 = scalar_select %p289, %s20, 3
      %p291 = scmp.lt.s32.totalorder %s21, 0
      %s292 = scalar_select %p291, %s21, 0
      %s293 = sadd.s32 %s292, %s290
      %s294 = smul.addr %s293, 8
      %s295 = scalar_lea.vmem %s4, %s294
      %p296 = pneg %p159
      %p297 = pneg %p156
      %p298 = pneg %p187
      %p299 = pneg %p184
      %p300 = scmp.lt.s32.totalorder %s20, 3
      %s301 = scalar_select %p300, %s20, 3
      %p302 = scmp.lt.s32.totalorder %s21, 0
      %s303 = scalar_select %p302, %s21, 0
      %s304 = sadd.s32 %s303, %s301
      %s305 = smul.addr %s304, 4
      %s306 = scalar_lea.vmem %s5, %s305
      %p307 = scmp.lt.s32.totalorder %s20, 3
      %s308 = scalar_select %p307, %s20, 3
      %p309 = scmp.lt.s32.totalorder %s21, 0
      %s310 = scalar_select %p309, %s21, 0
      %s311 = sadd.s32 %s310, %s308
      %s312 = smul.addr %s311, 4
      %s313 = scalar_lea.vmem %s0, %s312
      %p314 = scmp.lt.s32.totalorder %s20, 3
      %s315 = scalar_select %p314, %s20, 3
      %s316 = smul.addr %s315, 8
      %s317 = smul.addr %s316, 4
      %s318 = scalar_lea.vmem %s1, %s317
      %p319 = scmp.lt.s32.totalorder %s20, 3
      %s320 = scalar_select %p319, %s20, 3
      %s321 = smul.addr %s320, 4
      %s322 = scalar_lea.vmem %s2, %s321
      %p323 = scmp.lt.s32.totalorder %s20, 3
      %s324 = scalar_select %p323, %s20, 3
      %p325 = scmp.lt.s32.totalorder %s21, 0
      %s326 = scalar_select %p325, %s21, 0
      %s327 = sadd.s32 %s326, %s324
      %s328 = smul.addr %s327, 4
      %s329 = scalar_lea.vmem %s3, %s328
      %p330 = scmp.lt.s32.totalorder %s20, 3
      %s331 = scalar_select %p330, %s20, 3
      %p332 = scmp.lt.s32.totalorder %s21, 0
      %s333 = scalar_select %p332, %s21, 0
      %s334 = sadd.s32 %s333, %s331
      %s335 = smul.addr %s334, 8
      %s336 = scalar_lea.vmem %s4, %s335
      %p337 = scmp.lt.s32.totalorder %s20, 3
      %s338 = scalar_select %p337, %s20, 3
      %p339 = scmp.lt.s32.totalorder %s21, 0
      %s340 = scalar_select %p339, %s21, 0
      %s341 = sadd.s32 %s340, %s338
      %s342 = smul.addr %s341, 4
      %s343 = scalar_lea.vmem %s5, %s342
      %v345 = vld [vmem:[%s313] sm:$0xf]
      %v346 = vld [vmem:[%s318] sm:$0xf]
      %v347 = vld [vmem:[%s318 + $0x4] sm:$0xf]
      %v348 = vld [vmem:[%s318 + $0x8] sm:$0xf]
      %v349 = vld [vmem:[%s318 + $0xc] sm:$0xf]
      %v350 = vld [vmem:[%s318 + $0x10] sm:$0xf]
      %v351 = vld [vmem:[%s318 + $0x14] sm:$0xf]
      %v352 = vld [vmem:[%s318 + $0x18] sm:$0xf]
      %v353 = vld [vmem:[%s318 + $0x1c] sm:$0xf]
      %v362 = vunpack.c.l.b16 %v346
      %v363 = vunpack.c.l.b16 %v347
      %v364 = vunpack.c.l.b16 %v348
      %v365 = vunpack.c.l.b16 %v349
      %v366 = vunpack.c.l.b16 %v350
      %v367 = vunpack.c.l.b16 %v351
      %v368 = vunpack.c.l.b16 %v352
      %v369 = vunpack.c.l.b16 %v353
      %v370 = vpack.c.b16 %v363, %v362
      %v371 = vpack.c.b16 %v365, %v364
      %v372 = vpack.c.b16 %v367, %v366
      %v373 = vpack.c.b16 %v369, %v368
      %vm378 = vcmask 523264
      %v380 = vsel %vm378, %v345, 0
      %382 = vmatprep.subr.bf16.mxu0 0
      %383 = vmatpush1.bf16.msra.mxu0 0
      %384 = vmatprep.subr.bf16.mxu0 0
      %385 = vmatpush1.bf16.msra.mxu0 0
      %386 = vmatprep.subr.bf16.mxu0 0
      %387 = vmatpush1.bf16.msra.mxu0 0
      %388 = vmatprep.subr.bf16.mxu0 0
      %389 = vmatpush1.bf16.msra.mxu0 0
      %390 = vmatprep.subr.bf16.mxu0 0
      %391 = vmatpush1.bf16.msra.mxu0 %v373
      %392 = vmatprep.subr.bf16.mxu0 0
      %393 = vmatpush1.bf16.msra.mxu0 %v372
      %394 = vmatprep.subr.bf16.mxu0 0
      %395 = vmatpush1.bf16.msra.mxu0 %v371
      %396 = vmatprep.subr.bf16.mxu0 0
      %397 = vmatpush1.bf16.msra.mxu0 %v370
      %398 = vmatprep.subr.bf16.mxu0 0
      %399 = vmatpush2.bf16.msra.mxu0 0
      %400 = vmatprep.subr.bf16.mxu0 0
      %401 = vmatpush2.bf16.msra.mxu0 0
      %402 = vmatprep.subr.bf16.mxu0 0
      %403 = vmatpush2.bf16.msra.mxu0 0
      %404 = vmatprep.subr.bf16.mxu0 0
      %405 = vmatpush2.bf16.msra.mxu0 0
      %406 = vmatprep.subr.bf16.mxu0 0
      %407 = vmatpush2.bf16.msra.mxu0 0
      %408 = vmatprep.subr.bf16.mxu0 0
      %409 = vmatpush2.bf16.msra.mxu0 0
      %410 = vmatprep.subr.bf16.mxu0 0
      %411 = vmatpush2.bf16.msra.mxu0 0
      %412 = vmatprep.subr.bf16.mxu0 0
      %413 = vmatpush2.bf16.msra.mxu0 0
      %414 = vmatprep.mubr.bf16.mxu0 0
      %415 = vmatmul.mubr.bf16.gmra.mxu0 %v380
      %v416 = vpop.f32.mrf.mxu0
      %v417 = vadd.f32 0.0, %v416
      %v418 = vpop.f32.mrf.mxu0
      %v419 = vpop.f32.mrf.mxu0
      %v420 = vpop.f32.mrf.mxu0
      %421 = vdwg.mxu0
      %v422 = vmul.f32 %v417, 0.125
      %v423 = vld [vmem:[%s336] sm:$0xff]
      %v424 = vadd.f32 %v422, %v423
      %vm425 = vcmask 64512
      %v426 = vsel %vm425, %v424, -inf
      %427 = vmax.xlane.f32.xlu0 %v426
      %v428 = vpop.xlane.xlu0 %427
      %v429 = vsub.f32 %v424, %v428
      %v430 = vmul.f32 %v429, 1.442695
      %v431 = vpow.pop %v430
      %v432 = vsel %vm425, %v431, 0.0
      %433 = vadd.xlane.f32.xlu0 %v432
      %v434 = vpop.xlane.xlu0 %433
      %v435 = vrcp.pop %v434
      %v436 = vmul.f32 %v431, %v435
      %v437 = vpack.c.bf16 %v436, %v436
      %v438 = vld [vmem:[%s322] sm:$0xf]
      %v440 = vsel %vm425, %v437, 0
      %vm442 = vcmask 1043456
      %v444 = vsel %vm442, %v438, 0
      %446 = vmatprep.subr.bf16.mxu0 0
      %447 = vmatpush1.bf16.msra.mxu0 0
      %448 = vmatprep.subr.bf16.mxu0 0
      %449 = vmatpush1.bf16.msra.mxu0 0
      %450 = vmatprep.subr.bf16.mxu0 0
      %451 = vmatpush1.bf16.msra.mxu0 0
      %452 = vmatprep.subr.bf16.mxu0 0
      %453 = vmatpush1.bf16.msra.mxu0 0
      %454 = vmatprep.subr.bf16.mxu0 0
      %455 = vmatpush1.bf16.msra.mxu0 0
      %456 = vmatprep.subr.bf16.mxu0 0
      %457 = vmatpush1.bf16.msra.mxu0 0
      %458 = vmatprep.subr.bf16.mxu0 0
      %459 = vmatpush1.bf16.msra.mxu0 0
      %460 = vmatprep.subr.bf16.mxu0 0
      %461 = vmatpush1.bf16.msra.mxu0 %v444
      %462 = vmatprep.subr.bf16.mxu0 0
      %463 = vmatpush2.bf16.msra.mxu0 0
      %464 = vmatprep.subr.bf16.mxu0 0
      %465 = vmatpush2.bf16.msra.mxu0 0
      %466 = vmatprep.subr.bf16.mxu0 0
      %467 = vmatpush2.bf16.msra.mxu0 0
      %468 = vmatprep.subr.bf16.mxu0 0
      %469 = vmatpush2.bf16.msra.mxu0 0
      %470 = vmatprep.subr.bf16.mxu0 0
      %471 = vmatpush2.bf16.msra.mxu0 0
      %472 = vmatprep.subr.bf16.mxu0 0
      %473 = vmatpush2.bf16.msra.mxu0 0
      %474 = vmatprep.subr.bf16.mxu0 0
      %475 = vmatpush2.bf16.msra.mxu0 0
      %476 = vmatprep.subr.bf16.mxu0 0
      %477 = vmatpush2.bf16.msra.mxu0 0
      %478 = vmatprep.mubr.bf16.mxu0 0
      %479 = vmatmul.mubr.bf16.gmra.mxu0 %v440
      %v480 = vpop.f32.mrf.mxu0
      %v481 = vadd.f32 0.0, %v480
      %v482 = vpop.f32.mrf.mxu0
      %v483 = vpop.f32.mrf.mxu0
      %v484 = vpop.f32.mrf.mxu0
      %485 = vdwg.mxu0
      %v486 = vld [vmem:[%s329] sm:$0xf]
      %v487 = vunpack.c.l.bf16 %v486
      %v488 = vmul.f32 %v487, %v481
      %v489 = vpack.c.bf16 %v488, %v488
      %vm490 = vcmask 519168
      %491 = vst.msk [vmem:[%s343] sm:$0xf] %vm490, %v489
      %p492 = scmp.lt.s32.totalorder %s20, 3
      %s493 = scalar_select %p492, %s20, 3
      %p494 = scmp.lt.s32.totalorder %s21, 0
      %s495 = scalar_select %p494, %s21, 0
      %s496 = sadd.s32 %s495, %s493
      %s497 = smul.addr %s496, 4
      %s498 = scalar_lea.vmem %s5, %s497
      // Predicated region
      $region41: #{tri_att_start.4} parent=39 // pred_check
        %p499 = pneg %p184
      $region42: #{tri_att_start.4} parent=39 // pred_check_branch
        %501 = sbr.rel (%p499) target = $region44
      $region43: #{tri_att_start.4} parent=39 // pred_region
        _
      $region44: #{tri_att_start.4} parent=39 // pred_fallthru
        _
    $region40: #{tri_att_start.4} parent=5 // pred_fallthru
      _
    %p502 = scmp.le.s32.totalorder 2, %s11
    // Predicated region
    $region45: #{tri_att_start.4} parent=5 // pred_check
      %p503 = pneg %p502
    $region46: #{tri_att_start.4} parent=5 // pred_check_branch
      %505 = sbr.rel (%p503) target = $region48
    $region47: #{tri_att_start.4} parent=5 // pred_region
      %s506 = ssub.s32 %s11, 2
      // Predicated region
      $region49: #{tri_att_start.4} parent=47 // pred_check
        %p507 = pneg %p190
      $region50: #{tri_att_start.4} parent=47 // pred_check_branch
        %509 = sbr.rel (%p507) target = $region52
      $region51: #{tri_att_start.4} parent=47 // pred_region
        %p510 = scmp.lt.s32.totalorder %s22, 3
        %s511 = scalar_select %p510, %s22, 3
        %p512 = scmp.lt.s32.totalorder %s23, 0
        %s513 = scalar_select %p512, %s23, 0
        %s514 = sadd.s32 %s513, %s511
        %s515 = smul.addr %s514, 4
        %s516 = scalar_lea.vmem %s5, %s515
      $region52: #{tri_att_start.4} parent=47 // pred_fallthru
        _
    $region48: #{tri_att_start.4} parent=5 // pred_fallthru
      _
  $region6: #{tri_att_start.4} parent=0 // loop_footer
    %s15 = sadd.s32 1, %s11
  $region7: #{tri_att_start.4} parent=0 // loop_footer_branch
    %10 = sbr.rel target = $region3
  $region8: #{tri_att_start.4} parent=0 // loop_exit
    _

// kernel: tri_att_start.5
$region0: #{tri_att_start.5}
  #allocation0 [shape = 'u32[]', space=smem, size = 0x4, offset = 0x4, fixed_abs, tag = 'smem constant byte address 0x4 - core index']
  #allocation1 [shape = 'u32[144,128]{1,0:T(1,128)}', space=vmem, size = 0x12000, scoped, tag = 'internal scratch']
  %s0 = inlined_call_operand.vmem [shape: bf16[64,32], index: 0, kind: input, shape index: {}]
  %s1 = inlined_call_operand.vmem [shape: bf16[32,32], index: 1, kind: input, shape index: {}]
  %s2 = inlined_call_operand.vmem [shape: f32[1,32], index: 2, kind: input, shape index: {}]
  %s3 = inlined_call_operand.hbm [shape: f32[64,32], index: 3, kind: output, shape index: {}]
  %s4 = sld [smem:[#allocation0]]
  $region22: #{tri_att_start.5} parent=0
    _
  %s6 = ssub.s32 1, %s4
  %s7 = scalar_select 0, %s6, %s4
  $region1: #{tri_att_start.5} parent=0
    #allocation2 [shape = 'u8[32768]{0}', space=vmem, size = 0x8000, scoped, tag = 'output window, operand 0, single buffered']
    #allocation3 [shape = 's32[1]{0}', space=sflag, size = 0x4, scoped, tag = 'scoped memory for tri_att_start.5']
    %8 = vsyncpa [#allocation3], 0
    // Predicated region
    $region2: #{tri_att_start.5} parent=1 // pred_check
      _
    $region3: #{tri_att_start.5} parent=1 // pred_check_branch
      %10 = sbr.rel (0) target = $region5
    $region4: #{tri_att_start.5} parent=1 // pred_region
      _
    $region5: #{tri_att_start.5} parent=1 // pred_fallthru
      _
    // Predicated region
    $region6: #{tri_att_start.5} parent=1 // pred_check
      _
    $region7: #{tri_att_start.5} parent=1 // pred_check_branch
      %12 = sbr.rel (0) target = $region9
    $region8: #{tri_att_start.5} parent=1 // pred_region
      _
    $region9: #{tri_att_start.5} parent=1 // pred_fallthru
      _
    // Predicated region
    $region10: #{tri_att_start.5} parent=1 // pred_check
      _
    $region11: #{tri_att_start.5} parent=1 // pred_check_branch
      %14 = sbr.rel (0) target = $region13
    $region12: #{tri_att_start.5} parent=1 // pred_region
      _
    $region13: #{tri_att_start.5} parent=1 // pred_fallthru
      _
    %v16 = vld [vmem:[%s0] sm:$0xf]
    %v17 = vld [vmem:[%s0 + $0x4] sm:$0xf]
    %v18 = vld [vmem:[%s0 + $0x8] sm:$0xf]
    %v19 = vld [vmem:[%s0 + $0xc] sm:$0xf]
    %v20 = vld [vmem:[%s0 + $0x10] sm:$0xf]
    %v21 = vld [vmem:[%s0 + $0x14] sm:$0xf]
    %v22 = vld [vmem:[%s0 + $0x18] sm:$0xf]
    %v23 = vld [vmem:[%s0 + $0x1c] sm:$0xf]
    %v24 = vld [vmem:[%s1] sm:$0xf]
    %v25 = vld [vmem:[%s1 + $0x4] sm:$0xf]
    %v26 = vld [vmem:[%s1 + $0x8] sm:$0xf]
    %v27 = vld [vmem:[%s1 + $0xc] sm:$0xf]
    %v28 = vld [vmem:[%s2] sm:$0x1]
    %v30 = vlaneseq
    %v31 = vshrl.u32 %v30, 7
    %v32 = vsub.s32 0, %v31
    %v33 = vrot.slane %v28, %v32
    %v43 = vunpack.c.l.b16 %v16
    %v44 = vunpack.c.l.b16 %v17
    %v45 = vunpack.c.l.b16 %v18
    %v46 = vunpack.c.l.b16 %v19
    %v47 = vunpack.c.l.b16 %v20
    %v48 = vunpack.c.l.b16 %v21
    %v49 = vunpack.c.l.b16 %v22
    %v50 = vunpack.c.l.b16 %v23
    %v51 = vpack.c.b16 %v44, %v43
    %v52 = vpack.c.b16 %v46, %v45
    %v53 = vpack.c.b16 %v48, %v47
    %v54 = vpack.c.b16 %v50, %v49
    %v59 = vunpack.c.l.b16 %v24
    %v60 = vunpack.c.l.b16 %v25
    %v61 = vunpack.c.l.b16 %v26
    %v62 = vunpack.c.l.b16 %v27
    %v63 = vpack.c.b16 %v60, %v59
    %v64 = vpack.c.b16 %v62, %v61
    %vm67 = vcmask 261120
    %v69 = vsel %vm67, %v51, 0
    %v72 = vsel %vm67, %v52, 0
    %v75 = vsel %vm67, %v53, 0
    %v78 = vsel %vm67, %v54, 0
    %80 = vmatprep.subr.bf16.mxu0 0
    %81 = vmatpush1.bf16.msra.mxu0 0
    %82 = vmatprep.subr.bf16.mxu0 0
    %83 = vmatpush1.bf16.msra.mxu0 0
    %84 = vmatprep.subr.bf16.mxu0 0
    %85 = vmatpush1.bf16.msra.mxu0 0
    %86 = vmatprep.subr.bf16.mxu0 0
    %87 = vmatpush1.bf16.msra.mxu0 0
    %88 = vmatprep.subr.bf16.mxu0 0
    %89 = vmatpush1.bf16.msra.mxu0 0
    %90 = vmatprep.subr.bf16.mxu0 0
    %91 = vmatpush1.bf16.msra.mxu0 0
    %92 = vmatprep.subr.bf16.mxu0 0
    %93 = vmatpush1.bf16.msra.mxu0 %v64
    %94 = vmatprep.subr.bf16.mxu0 0
    %95 = vmatpush1.bf16.msra.mxu0 %v63
    %96 = vmatprep.subr.bf16.mxu0 0
    %97 = vmatpush2.bf16.msra.mxu0 0
    %98 = vmatprep.subr.bf16.mxu0 0
    %99 = vmatpush2.bf16.msra.mxu0 0
    %100 = vmatprep.subr.bf16.mxu0 0
    %101 = vmatpush2.bf16.msra.mxu0 0
    %102 = vmatprep.subr.bf16.mxu0 0
    %103 = vmatpush2.bf16.msra.mxu0 0
    %104 = vmatprep.subr.bf16.mxu0 0
    %105 = vmatpush2.bf16.msra.mxu0 0
    %106 = vmatprep.subr.bf16.mxu0 0
    %107 = vmatpush2.bf16.msra.mxu0 0
    %108 = vmatprep.subr.bf16.mxu0 0
    %109 = vmatpush2.bf16.msra.mxu0 0
    %110 = vmatprep.subr.bf16.mxu0 0
    %111 = vmatpush2.bf16.msra.mxu0 0
    %112 = vmatprep.mubr.bf16.mxu0 0
    %113 = vmatmul.mubr.bf16.gmra.mxu0 %v69
    %v114 = vpop.f32.mrf.mxu0
    %v115 = vadd.f32 %v33, %v114
    %v116 = vpop.f32.mrf.mxu0
    %v117 = vpop.f32.mrf.mxu0
    %v118 = vadd.f32 %v33, %v117
    %v119 = vpop.f32.mrf.mxu0
    %120 = vmatprep.mubr.bf16.mxu0 0
    %121 = vmatmul.mubr.bf16.gmra.mxu0 %v72
    %v122 = vpop.f32.mrf.mxu0
    %v123 = vadd.f32 %v33, %v122
    %v124 = vpop.f32.mrf.mxu0
    %v125 = vpop.f32.mrf.mxu0
    %v126 = vadd.f32 %v33, %v125
    %v127 = vpop.f32.mrf.mxu0
    %128 = vmatprep.mubr.bf16.mxu0 0
    %129 = vmatmul.mubr.bf16.gmra.mxu0 %v75
    %v130 = vpop.f32.mrf.mxu0
    %v131 = vadd.f32 %v33, %v130
    %v132 = vpop.f32.mrf.mxu0
    %v133 = vpop.f32.mrf.mxu0
    %v134 = vadd.f32 %v33, %v133
    %v135 = vpop.f32.mrf.mxu0
    %136 = vmatprep.mubr.bf16.mxu0 0
    %137 = vmatmul.mubr.bf16.gmra.mxu0 %v78
    %v138 = vpop.f32.mrf.mxu0
    %v139 = vadd.f32 %v33, %v138
    %v140 = vpop.f32.mrf.mxu0
    %v141 = vpop.f32.mrf.mxu0
    %v142 = vadd.f32 %v33, %v141
    %v143 = vpop.f32.mrf.mxu0
    %144 = vdwg.mxu0
    %145 = vst.msk [vmem:[#allocation2] sm:$0xff] %vm67, %v115
    %146 = vst.msk [vmem:[#allocation2 + $0x8] sm:$0xff] %vm67, %v118
    %147 = vst.msk [vmem:[#allocation2 + $0x10] sm:$0xff] %vm67, %v123
    %148 = vst.msk [vmem:[#allocation2 + $0x18] sm:$0xff] %vm67, %v126
    %149 = vst.msk [vmem:[#allocation2 + $0x20] sm:$0xff] %vm67, %v131
    %150 = vst.msk [vmem:[#allocation2 + $0x28] sm:$0xff] %vm67, %v134
    %151 = vst.msk [vmem:[#allocation2 + $0x30] sm:$0xff] %vm67, %v139
    %152 = vst.msk [vmem:[#allocation2 + $0x38] sm:$0xff] %vm67, %v142
    // Predicated region
    $region14: #{tri_att_start.5} parent=1 // pred_check
      _
    $region15: #{tri_att_start.5} parent=1 // pred_check_branch
      %154 = sbr.rel (0) target = $region17
    $region16: #{tri_att_start.5} parent=1 // pred_region
      %s156 = ssub.s32 1024, 1024
      %157 = vsyncadd [#allocation3], %s156
      %s158 = sshll.u32 [#allocation2], 4
      %s159 = int_to_ptr.vmem [resolvable:$true] %s158
      %164 = dma.vmem_to_hbm [thread:$0]  %s159, 1024, %s3, [#allocation3], 128, 128, 8
    $region17: #{tri_att_start.5} parent=1 // pred_fallthru
      _
    // Predicated region
    $region18: #{tri_att_start.5} parent=1 // pred_check
      _
    $region19: #{tri_att_start.5} parent=1 // pred_check_branch
      %166 = sbr.rel (0) target = $region21
    $region20: #{tri_att_start.5} parent=1 // pred_region
      %167 = dma.done [#allocation3], 1024
    $region21: #{tri_att_start.5} parent=1 // pred_fallthru
      _
    %168 = vsyncpa [#allocation3], 1

</llo_original>
